<compile_context>
chip_gen: v7x
topology: tpu7x:2x2x1
jax: 0.10.0
libtpu: 0.0.40
codegen_flags: <defaults>
</compile_context>

<pallas_src>
import functools

import jax
import jax.numpy as jnp
from jax.experimental import pallas as pl
from jax.experimental.pallas import tpu as pltpu

EPS = 1e-5      # PyTorch BatchNorm2d default eps
LANE = 128


def _round_up(x, m):
    return (x + m - 1) // m * m


def _conv_stats_kernel(p_ref, w_ref, bias_ref, y_ref, s_ref, *,
                       tm, m_valid, need_mask):
    """Tile of the im2col matmul (+bias) fused with BN statistic accumulation.

    p_ref:    (TM, Kp)  bf16 im2col patches
    w_ref:    (Kp, Cp)  bf16 reshaped conv weights
    bias_ref: (1, Cp)   f32 conv bias
    y_ref:    (TM, Cp)  f32 conv output tile
    s_ref:    (8, Cp)   f32 accumulator; row 0 = sum, row 1 = sum of squares
    """
    i = pl.program_id(0)

    @pl.when(i == 0)
    def _init():
        s_ref[...] = jnp.zeros_like(s_ref)

    # One deep MXU contraction per tile, f32 accumulation.
    y = jnp.dot(p_ref[...], w_ref[...], preferred_element_type=jnp.float32)
    y = y + bias_ref[...]
    y_ref[...] = y

    # Batch statistics on the fly (VPU/XLU work hidden under the MXU).
    if need_mask:  # exclude rows that exist only because of M padding
        rows = i * tm + jax.lax.broadcasted_iota(jnp.int32, y.shape, 0)
        yv = jnp.where(rows < m_valid, y, 0.0)
    else:
        yv = y
    s_ref[0:1, :] += jnp.sum(yv, axis=0, keepdims=True)
    s_ref[1:2, :] += jnp.sum(yv * yv, axis=0, keepdims=True)


def _bn_relu_kernel(y_ref, s_ref, g_ref, b_ref, o_ref, *,
                    count, with_nonlinearity):
    """Tiled normalize (+ affine) + optional ReLU using the fused statistics."""
    inv_count = 1.0 / count
    mean = s_ref[0:1, :] * inv_count
    var = s_ref[1:2, :] * inv_count - mean * mean        # biased variance
    scale = jax.lax.rsqrt(var + EPS) * g_ref[...]
    shift = b_ref[...] - mean * scale
    out = y_ref[...] * scale + shift
    if with_nonlinearity:
        out = jnp.maximum(out, 0.0)
    o_ref[...] = out


def conv_block(x_nchw, w_oihw, bias, gamma, beta, *,
               padding=1, stride=1, with_nonlinearity=True,
               compute_dtype=jnp.bfloat16, tile_m=256):
    """Forward pass of ConvBlock. Inputs/outputs are NCHW like the PyTorch module."""
    assert stride == 1, "kernel implements the default stride=1 path"
    N, Cin, H, W = x_nchw.shape
    Cout, _, KH, KW = w_oihw.shape

    # ---------- wrapper-side layout plumbing (no compute hoisting) ----------
    x = jnp.transpose(x_nchw, (0, 2, 3, 1)).astype(compute_dtype)      # NHWC
    xp = jnp.pad(x, ((0, 0), (padding, padding), (padding, padding), (0, 0)))
    Hp, Wp = H + 2 * padding, W + 2 * padding
    Ho, Wo = Hp - KH + 1, Wp - KW + 1

    # im2col: last dim = KH*KW*Cin so the kernel's contraction is deep and the
    # lane axis is dense after padding to 128.
    taps = [xp[:, kh:kh + Ho, kw:kw + Wo, :]
            for kh in range(KH) for kw in range(KW)]
    patches = jnp.concatenate(taps, axis=-1).reshape(N * Ho * Wo, KH * KW * Cin)

    M = N * Ho * Wo
    K = KH * KW * Cin
    TM = min(tile_m, _round_up(M, 8))
    Mp = _round_up(M, TM)
    Kp = _round_up(K, LANE)
    Cp = _round_up(Cout, LANE)
    n_tiles = Mp // TM

    patches = jnp.pad(patches, ((0, Mp - M), (0, Kp - K)))
    wmat = jnp.transpose(w_oihw, (2, 3, 1, 0)).reshape(K, Cout)
    wmat = jnp.pad(wmat.astype(compute_dtype), ((0, Kp - K), (0, Cp - Cout)))
    bias2 = jnp.pad(bias.astype(jnp.float32).reshape(1, Cout),
                    ((0, 0), (0, Cp - Cout)))
    gamma2 = jnp.pad(gamma.astype(jnp.float32).reshape(1, Cout),
                     ((0, 0), (0, Cp - Cout)))
    beta2 = jnp.pad(beta.astype(jnp.float32).reshape(1, Cout),
                    ((0, 0), (0, Cp - Cout)))

    vmem_limit = 32 * 1024 * 1024  # fits v7x's 64 MiB physical with headroom

    # ---- pass 1: conv (+bias) and fused per-channel sum / sum-of-squares ----
    conv_out, stats = pl.pallas_call(
        functools.partial(_conv_stats_kernel, tm=TM, m_valid=M,
                          need_mask=(Mp != M)),
        out_shape=(jax.ShapeDtypeStruct((Mp, Cp), jnp.float32),
                   jax.ShapeDtypeStruct((8, Cp), jnp.float32)),
        grid=(n_tiles,),
        in_specs=[
            pl.BlockSpec((TM, Kp), lambda i: (i, 0)),
            pl.BlockSpec((Kp, Cp), lambda i: (0, 0)),
            pl.BlockSpec((1, Cp), lambda i: (0, 0)),
        ],
        out_specs=(
            pl.BlockSpec((TM, Cp), lambda i: (i, 0)),
            pl.BlockSpec((8, Cp), lambda i: (0, 0)),   # resident accumulator
        ),
        compiler_params=pltpu.CompilerParams(
            dimension_semantics=("arbitrary",),        # stats accumulate across grid
            vmem_limit_bytes=vmem_limit),
    )(patches, wmat, bias2)

    # ---- pass 2: tiled BatchNorm (batch stats) + optional ReLU ----
    out2d = pl.pallas_call(
        functools.partial(_bn_relu_kernel, count=float(M),
                          with_nonlinearity=with_nonlinearity),
        out_shape=jax.ShapeDtypeStruct((Mp, Cp), jnp.float32),
        grid=(n_tiles,),
        in_specs=[
            pl.BlockSpec((TM, Cp), lambda i: (i, 0)),
            pl.BlockSpec((8, Cp), lambda i: (0, 0)),
            pl.BlockSpec((1, Cp), lambda i: (0, 0)),
            pl.BlockSpec((1, Cp), lambda i: (0, 0)),
        ],
        out_specs=pl.BlockSpec((TM, Cp), lambda i: (i, 0)),
        compiler_params=pltpu.CompilerParams(
            dimension_semantics=("parallel",),
            vmem_limit_bytes=vmem_limit),
    )(conv_out, stats, gamma2, beta2)

    out = out2d[:M, :Cout].reshape(N, Ho, Wo, Cout)
    return jnp.transpose(out, (0, 3, 1, 2))  # back to NCHW
    # TODO(synk): running_mean / running_var buffer updates (training side effect
    # of nn.BatchNorm2d) are not modeled; they don't affect the returned tensor.


if __name__ == "__main__":
    key = jax.random.PRNGKey(0)
    k_x, k_w, k_b = jax.random.split(key, 3)

    N, Cin, H, W = 2, 4, 16, 16
    Cout, Kk = 8, 3

    x = jax.random.normal(k_x, (N, Cin, H, W), jnp.float32)

    # Deterministic parameter init (Conv2d-style uniform bounds; BN defaults).
    fan_in = Cin * Kk * Kk
    bound = 1.0 / (fan_in ** 0.5)
    w = jax.random.uniform(k_w, (Cout, Cin, Kk, Kk), jnp.float32, -bound, bound)
    b = jax.random.uniform(k_b, (Cout,), jnp.float32, -bound, bound)
    gamma = jnp.ones((Cout,), jnp.float32)   # nn.BatchNorm2d default weight
    beta = jnp.zeros((Cout,), jnp.float32)   # nn.BatchNorm2d default bias

    out = jax.block_until_ready(jax.jit(conv_block)(x, w, b, gamma, beta))

    # Pure-JAX reference using the same bf16 matmul operands / f32 accumulation
    # (conv -> training-mode BN (biased variance) -> ReLU).
    xh = jnp.transpose(x, (0, 2, 3, 1)).astype(jnp.bfloat16)
    wh = jnp.transpose(w, (2, 3, 1, 0)).astype(jnp.bfloat16)
    conv_ref = jax.lax.conv_general_dilated(
        xh, wh, window_strides=(1, 1), padding=((1, 1), (1, 1)),
        dimension_numbers=("NHWC", "HWIO", "NHWC"),
        preferred_element_type=jnp.float32) + b
    m = conv_ref.mean(axis=(0, 1, 2), keepdims=True)
    v = ((conv_ref - m) ** 2).mean(axis=(0, 1, 2), keepdims=True)
    ref = jnp.maximum((conv_ref - m) * jax.lax.rsqrt(v + EPS) * gamma + beta, 0.0)
    ref = jnp.transpose(ref, (0, 3, 1, 2))

    err = float(jnp.max(jnp.abs(out - ref)))
    assert jnp.allclose(out, ref, rtol=2e-3, atol=2e-3), f"max abs err {err}"
    print("KERNEL_OK")
</pallas_src>

<mosaic_0001>
module attributes {stable_mosaic.version = 11 : i64} {
  func.func @_bn_relu_kernel(%arg0: i32, %arg1: memref<256x128xf32, #tpu.memory_space<vmem>>, %arg2: memref<8x128xf32, #tpu.memory_space<vmem>>, %arg3: memref<1x128xf32, #tpu.memory_space<vmem>>, %arg4: memref<1x128xf32, #tpu.memory_space<vmem>>, %arg5: memref<256x128xf32, #tpu.memory_space<vmem>>) attributes {dimension_semantics = [#tpu.dimension_semantics<parallel>], iteration_bounds = array<i64: 2>, scalar_prefetch = 0 : i64, scratch_operands = 0 : i64, tpu.core_type = #tpu.core_type<tc>, window_params = [{transform_indices = @transform_0, window_bounds = array<i64: 256, 128>}, {pipeline_mode = #tpu.pipeline_mode<synchronous>, transform_indices = @transform_1, window_bounds = array<i64: 8, 128>}, {pipeline_mode = #tpu.pipeline_mode<synchronous>, transform_indices = @transform_2, window_bounds = array<i64: 1, 128>}, {pipeline_mode = #tpu.pipeline_mode<synchronous>, transform_indices = @transform_3, window_bounds = array<i64: 1, 128>}, {transform_indices = @transform_4, window_bounds = array<i64: 256, 128>}]} {
    %c0 = arith.constant 0 : index
    %c0_0 = arith.constant 0 : index
    %0 = vector.load %arg2[%c0, %c0_0] : memref<8x128xf32, #tpu.memory_space<vmem>>, vector<1x128xf32>
    %cst = arith.constant 0.001953125 : f32
    %1 = vector.broadcast %cst : f32 to vector<1x128xf32>
    %2 = arith.mulf %0, %1 : vector<1x128xf32>
    %c1 = arith.constant 1 : index
    %c0_1 = arith.constant 0 : index
    %3 = vector.load %arg2[%c1, %c0_1] : memref<8x128xf32, #tpu.memory_space<vmem>>, vector<1x128xf32>
    %cst_2 = arith.constant 0.001953125 : f32
    %4 = vector.broadcast %cst_2 : f32 to vector<1x128xf32>
    %5 = arith.mulf %3, %4 : vector<1x128xf32>
    %6 = arith.mulf %2, %2 : vector<1x128xf32>
    %7 = arith.subf %5, %6 : vector<1x128xf32>
    %cst_3 = arith.constant 9.99999974E-6 : f32
    %8 = vector.broadcast %cst_3 : f32 to vector<1x128xf32>
    %9 = arith.addf %7, %8 : vector<1x128xf32>
    %10 = math.rsqrt %9 : vector<1x128xf32>
    %c0_4 = arith.constant 0 : index
    %c0_5 = arith.constant 0 : index
    %11 = vector.load %arg3[%c0_4, %c0_5] : memref<1x128xf32, #tpu.memory_space<vmem>>, vector<1x128xf32>
    %12 = arith.mulf %10, %11 : vector<1x128xf32>
    %c0_6 = arith.constant 0 : index
    %c0_7 = arith.constant 0 : index
    %13 = vector.load %arg4[%c0_6, %c0_7] : memref<1x128xf32, #tpu.memory_space<vmem>>, vector<1x128xf32>
    %14 = arith.mulf %2, %12 : vector<1x128xf32>
    %15 = arith.subf %13, %14 : vector<1x128xf32>
    %c0_8 = arith.constant 0 : index
    %c0_9 = arith.constant 0 : index
    %16 = vector.load %arg1[%c0_8, %c0_9] : memref<256x128xf32, #tpu.memory_space<vmem>>, vector<256x128xf32>
    %17 = vector.broadcast %12 : vector<1x128xf32> to vector<256x128xf32>
    %18 = arith.mulf %16, %17 : vector<256x128xf32>
    %19 = vector.broadcast %15 : vector<1x128xf32> to vector<256x128xf32>
    %20 = arith.addf %18, %19 : vector<256x128xf32>
    %cst_10 = arith.constant 0.000000e+00 : f32
    %21 = vector.broadcast %cst_10 : f32 to vector<256x128xf32>
    %22 = arith.maximumf %20, %21 : vector<256x128xf32>
    %c0_11 = arith.constant 0 : index
    %c0_12 = arith.constant 0 : index
    %23 = vector.load %arg5[%c0_11, %c0_12] : memref<256x128xf32, #tpu.memory_space<vmem>>, vector<256x128xf32>
    tpu.vector_store %arg5[%c0_11, %c0_12], %22 {strides = array<i32>} : memref<256x128xf32, #tpu.memory_space<vmem>>, vector<256x128xf32>,
    return
  }
  func.func @transform_0(%arg0: i32) -> (i32, i32) {
    %c0_i32 = arith.constant 0 : i32
    %c0_i32_0 = arith.constant 0 : i32
    return %arg0, %c0_i32 : i32, i32
  }
  func.func @transform_1(%arg0: i32) -> (i32, i32) {
    %c0_i32 = arith.constant 0 : i32
    %c0_i32_0 = arith.constant 0 : i32
    %c0_i32_1 = arith.constant 0 : i32
    return %c0_i32, %c0_i32_0 : i32, i32
  }
  func.func @transform_2(%arg0: i32) -> (i32, i32) {
    %c0_i32 = arith.constant 0 : i32
    %c0_i32_0 = arith.constant 0 : i32
    %c0_i32_1 = arith.constant 0 : i32
    return %c0_i32, %c0_i32_0 : i32, i32
  }
  func.func @transform_3(%arg0: i32) -> (i32, i32) {
    %c0_i32 = arith.constant 0 : i32
    %c0_i32_0 = arith.constant 0 : i32
    %c0_i32_1 = arith.constant 0 : i32
    return %c0_i32, %c0_i32_0 : i32, i32
  }
  func.func @transform_4(%arg0: i32) -> (i32, i32) {
    %c0_i32 = arith.constant 0 : i32
    %c0_i32_0 = arith.constant 0 : i32
    return %arg0, %c0_i32 : i32, i32
  }
}

module attributes {stable_mosaic.version = 11 : i64} {
  func.func @_conv_stats_kernel(%arg0: i32, %arg1: memref<256x128xbf16, #tpu.memory_space<vmem>>, %arg2: memref<128x128xbf16, #tpu.memory_space<vmem>>, %arg3: memref<1x128xf32, #tpu.memory_space<vmem>>, %arg4: memref<256x128xf32, #tpu.memory_space<vmem>>, %arg5: memref<8x128xf32, #tpu.memory_space<vmem>>) attributes {dimension_semantics = [#tpu.dimension_semantics<arbitrary>], iteration_bounds = array<i64: 2>, scalar_prefetch = 0 : i64, scratch_operands = 0 : i64, tpu.core_type = #tpu.core_type<tc>, window_params = [{transform_indices = @transform_0, window_bounds = array<i64: 256, 128>}, {pipeline_mode = #tpu.pipeline_mode<synchronous>, transform_indices = @transform_1, window_bounds = array<i64: 128, 128>}, {pipeline_mode = #tpu.pipeline_mode<synchronous>, transform_indices = @transform_2, window_bounds = array<i64: 1, 128>}, {transform_indices = @transform_3, window_bounds = array<i64: 256, 128>}, {pipeline_mode = #tpu.pipeline_mode<synchronous>, transform_indices = @transform_4, window_bounds = array<i64: 8, 128>}]} {
    %c0_i32 = arith.constant 0 : i32
    %0 = arith.cmpi eq, %arg0, %c0_i32 : i32
    %1 = arith.extui %0 : i1 to i32
    %c0_i32_0 = arith.constant 0 : i32
    %2 = arith.cmpi ne, %1, %c0_i32_0 : i32
    scf.if %2 {
      %cst_17 = arith.constant 0.000000e+00 : f32
      %21 = vector.broadcast %cst_17 : f32 to vector<8x128xf32>
      %c0_18 = arith.constant 0 : index
      %c0_19 = arith.constant 0 : index
      %22 = vector.load %arg5[%c0_18, %c0_19] : memref<8x128xf32, #tpu.memory_space<vmem>>, vector<8x128xf32>
      tpu.vector_store %arg5[%c0_18, %c0_19], %21 {strides = array<i32>} : memref<8x128xf32, #tpu.memory_space<vmem>>, vector<8x128xf32>,
    } else {
    }
    %c0 = arith.constant 0 : index
    %c0_1 = arith.constant 0 : index
    %3 = vector.load %arg1[%c0, %c0_1] : memref<256x128xbf16, #tpu.memory_space<vmem>>, vector<256x128xbf16>
    %c0_2 = arith.constant 0 : index
    %c0_3 = arith.constant 0 : index
    %4 = vector.load %arg2[%c0_2, %c0_3] : memref<128x128xbf16, #tpu.memory_space<vmem>>, vector<128x128xbf16>
    %cst = arith.constant dense<0.000000e+00> : vector<256x128xf32>
    %5 = tpu.matmul %3, %4, %cst {dimension_numbers = #tpu.dot_dimension_numbers<[1], [0], [0], [1], [0, 0, 1, 1], [], []>} : vector<256x128xbf16>, vector<128x128xbf16>, vector<256x128xf32> -> vector<256x128xf32>
    %c0_4 = arith.constant 0 : index
    %c0_5 = arith.constant 0 : index
    %6 = vector.load %arg3[%c0_4, %c0_5] : memref<1x128xf32, #tpu.memory_space<vmem>>, vector<1x128xf32>
    %7 = vector.broadcast %6 : vector<1x128xf32> to vector<256x128xf32>
    %8 = arith.addf %5, %7 : vector<256x128xf32>
    %c0_6 = arith.constant 0 : index
    %c0_7 = arith.constant 0 : index
    %9 = vector.load %arg4[%c0_6, %c0_7] : memref<256x128xf32, #tpu.memory_space<vmem>>, vector<256x128xf32>
    tpu.vector_store %arg4[%c0_6, %c0_7], %8 {strides = array<i32>} : memref<256x128xf32, #tpu.memory_space<vmem>>, vector<256x128xf32>,
    %c0_8 = arith.constant 0 : index
    %c0_9 = arith.constant 0 : index
    %10 = vector.load %arg5[%c0_8, %c0_9] : memref<8x128xf32, #tpu.memory_space<vmem>>, vector<1x128xf32>
    %cst_10 = arith.constant dense<0.000000e+00> : vector<128xf32>
    %11 = vector.multi_reduction <add>, %8, %cst_10 [0] : vector<256x128xf32> to vector<128xf32>
    %12 = vector.shape_cast %11 : vector<128xf32> to vector<1x128xf32>
    %13 = arith.addf %10, %12 : vector<1x128xf32>
    %c0_11 = arith.constant 0 : index
    %c0_12 = arith.constant 0 : index
    %14 = vector.load %arg5[%c0_11, %c0_12] : memref<8x128xf32, #tpu.memory_space<vmem>>, vector<1x128xf32>
    tpu.vector_store %arg5[%c0_11, %c0_12], %13 {strides = array<i32>} : memref<8x128xf32, #tpu.memory_space<vmem>>, vector<1x128xf32>,
    %c1 = arith.constant 1 : index
    %c0_13 = arith.constant 0 : index
    %15 = vector.load %arg5[%c1, %c0_13] : memref<8x128xf32, #tpu.memory_space<vmem>>, vector<1x128xf32>
    %16 = arith.mulf %8, %8 : vector<256x128xf32>
    %cst_14 = arith.constant dense<0.000000e+00> : vector<128xf32>
    %17 = vector.multi_reduction <add>, %16, %cst_14 [0] : vector<256x128xf32> to vector<128xf32>
    %18 = vector.shape_cast %17 : vector<128xf32> to vector<1x128xf32>
    %19 = arith.addf %15, %18 : vector<1x128xf32>
    %c1_15 = arith.constant 1 : index
    %c0_16 = arith.constant 0 : index
    %20 = vector.load %arg5[%c1_15, %c0_16] : memref<8x128xf32, #tpu.memory_space<vmem>>, vector<1x128xf32>
    tpu.vector_store %arg5[%c1_15, %c0_16], %19 {strides = array<i32>} : memref<8x128xf32, #tpu.memory_space<vmem>>, vector<1x128xf32>,
    return
  }
  func.func @transform_0(%arg0: i32) -> (i32, i32) {
    %c0_i32 = arith.constant 0 : i32
    %c0_i32_0 = arith.constant 0 : i32
    return %arg0, %c0_i32 : i32, i32
  }
  func.func @transform_1(%arg0: i32) -> (i32, i32) {
    %c0_i32 = arith.constant 0 : i32
    %c0_i32_0 = arith.constant 0 : i32
    %c0_i32_1 = arith.constant 0 : i32
    return %c0_i32, %c0_i32_0 : i32, i32
  }
  func.func @transform_2(%arg0: i32) -> (i32, i32) {
    %c0_i32 = arith.constant 0 : i32
    %c0_i32_0 = arith.constant 0 : i32
    %c0_i32_1 = arith.constant 0 : i32
    return %c0_i32, %c0_i32_0 : i32, i32
  }
  func.func @transform_3(%arg0: i32) -> (i32, i32) {
    %c0_i32 = arith.constant 0 : i32
    %c0_i32_0 = arith.constant 0 : i32
    return %arg0, %c0_i32 : i32, i32
  }
  func.func @transform_4(%arg0: i32) -> (i32, i32) {
    %c0_i32 = arith.constant 0 : i32
    %c0_i32_0 = arith.constant 0 : i32
    %c0_i32_1 = arith.constant 0 : i32
    return %c0_i32, %c0_i32_0 : i32, i32
  }
}

</mosaic_0001>

<llo_original>
// kernel: conv_block.3
$region0: #{conv_block.3}
  #allocation0 [shape = 'u32[]', space=smem, size = 0x4, offset = 0x4, fixed_abs, tag = 'smem constant byte address 0x4 - core index']
  #allocation1 [shape = 'u32[144,128]{1,0:T(1,128)}', space=vmem, size = 0x12000, scoped, tag = 'internal scratch']
  %s0 = inlined_call_operand.vmem [shape: f32[512,128], index: 0, kind: input, shape index: {}]
  %s1 = inlined_call_operand.vmem [shape: f32[8,128], index: 1, kind: input, shape index: {}]
  %s2 = inlined_call_operand.vmem [shape: f32[1,128], index: 2, kind: input, shape index: {}]
  %s3 = inlined_call_operand.vmem [shape: f32[1,128], index: 3, kind: input, shape index: {}]
  %s4 = inlined_call_operand.vmem [shape: f32[512,128], index: 4, kind: output, shape index: {}]
  %s5 = sld [smem:[#allocation0]]
  $region49: #{conv_block.3} parent=0
    _
  %s7 = ssub.s32 1, %s5
  %s8 = scalar_select 0, %s7, %s5
  loop: start=0, step=1, limit=4
  $region2: #{conv_block.3} parent=0 // loop_pre_header
    _
  $region3: #{conv_block.3} parent=0 // loop_header
    %s10 = sphi 0, %s14
    %p11 = scmp.ge.s32.totalorder %s10, 4
    %s20 = sphi 0, %s22
    %s23 = sphi 0, %s20
    %s24 = sphi 0, %s23
    %s40 = sphi 0, %s24
    %s44 = sphi 0, %s44
    %s46 = sphi 0, %s44
    %s47 = sphi 0, %s46
    %s61 = sphi 0, %s47
    %s65 = sphi 0, %s65
    %s67 = sphi 0, %s65
    %s68 = sphi 0, %s67
    %s82 = sphi 0, %s68
    %s86 = sphi 0, %s86
    %s88 = sphi 0, %s86
    %s89 = sphi 0, %s88
    %s103 = sphi 0, %s89
    %s109 = sphi 0, %s111
    %s112 = sphi 0, %s109
    %s113 = sphi 0, %s112
    %s129 = sphi 0, %s113
  $region4: #{conv_block.3} parent=0 // loop_header_branch
    %13 = sbr.rel (%p11) target = $region8
  $region5: #{conv_block.3} parent=0 // loop_body
    %s15 = ssub.s32 %s10, 1
    %s16 = ssub.s32 %s10, 2
    %s17 = sadd.s32 %s10, 1
    %s18 = ssub.s32 %s10, %s17
    %p19 = scmp.eq.s32.totalorder %s18, 0
    %s21 = sadd.s32 %s20, 1
    %s22 = scalar_select %p19, %s20, %s21
    %p25 = pneg %p19
    %p26 = scmp.eq.s32.totalorder %s10, 1
    %p27 = por %p25, %p26
    %p28 = scmp.ne.s32.totalorder %s20, %s23
    %p29 = scmp.eq.s32.totalorder %s10, 0
    %p30 = por %p28, %p29
    %p31 = scmp.ne.s32.totalorder %s20, %s23
    %p32 = scmp.eq.s32.totalorder %s15, 1
    %p33 = por %p31, %p32
    %p34 = scmp.ne.s32.totalorder %s23, %s24
    %p35 = scmp.eq.s32.totalorder %s15, 0
    %p36 = por %p34, %p35
    %p37 = scmp.ne.s32.totalorder %s23, %s24
    %p38 = scmp.eq.s32.totalorder %s16, 1
    %p39 = por %p37, %p38
    %p41 = scmp.ne.s32.totalorder %s24, %s40
    %p42 = scmp.eq.s32.totalorder %s16, 0
    %p43 = por %p41, %p42
    %s45 = sadd.s32 %s44, 1
    %p48 = scmp.eq.s32.totalorder %s10, 1
    %p49 = scmp.ne.s32.totalorder %s44, %s46
    %p50 = scmp.eq.s32.totalorder %s10, 0
    %p51 = por %p49, %p50
    %p52 = scmp.ne.s32.totalorder %s44, %s46
    %p53 = scmp.eq.s32.totalorder %s15, 1
    %p54 = por %p52, %p53
    %p55 = scmp.ne.s32.totalorder %s46, %s47
    %p56 = scmp.eq.s32.totalorder %s15, 0
    %p57 = por %p55, %p56
    %p58 = scmp.ne.s32.totalorder %s46, %s47
    %p59 = scmp.eq.s32.totalorder %s16, 1
    %p60 = por %p58, %p59
    %p62 = scmp.ne.s32.totalorder %s47, %s61
    %p63 = scmp.eq.s32.totalorder %s16, 0
    %p64 = por %p62, %p63
    %s66 = sadd.s32 %s65, 1
    %p69 = scmp.eq.s32.totalorder %s10, 1
    %p70 = scmp.ne.s32.totalorder %s65, %s67
    %p71 = scmp.eq.s32.totalorder %s10, 0
    %p72 = por %p70, %p71
    %p73 = scmp.ne.s32.totalorder %s65, %s67
    %p74 = scmp.eq.s32.totalorder %s15, 1
    %p75 = por %p73, %p74
    %p76 = scmp.ne.s32.totalorder %s67, %s68
    %p77 = scmp.eq.s32.totalorder %s15, 0
    %p78 = por %p76, %p77
    %p79 = scmp.ne.s32.totalorder %s67, %s68
    %p80 = scmp.eq.s32.totalorder %s16, 1
    %p81 = por %p79, %p80
    %p83 = scmp.ne.s32.totalorder %s68, %s82
    %p84 = scmp.eq.s32.totalorder %s16, 0
    %p85 = por %p83, %p84
    %s87 = sadd.s32 %s86, 1
    %p90 = scmp.eq.s32.totalorder %s10, 1
    %p91 = scmp.ne.s32.totalorder %s86, %s88
    %p92 = scmp.eq.s32.totalorder %s10, 0
    %p93 = por %p91, %p92
    %p94 = scmp.ne.s32.totalorder %s86, %s88
    %p95 = scmp.eq.s32.totalorder %s15, 1
    %p96 = por %p94, %p95
    %p97 = scmp.ne.s32.totalorder %s88, %s89
    %p98 = scmp.eq.s32.totalorder %s15, 0
    %p99 = por %p97, %p98
    %p100 = scmp.ne.s32.totalorder %s88, %s89
    %p101 = scmp.eq.s32.totalorder %s16, 1
    %p102 = por %p100, %p101
    %p104 = scmp.ne.s32.totalorder %s89, %s103
    %p105 = scmp.eq.s32.totalorder %s16, 0
    %p106 = por %p104, %p105
    %s107 = ssub.s32 %s10, %s17
    %p108 = scmp.eq.s32.totalorder %s107, 0
    %s110 = sadd.s32 %s109, 1
    %s111 = scalar_select %p108, %s109, %s110
    %p114 = pneg %p108
    %p115 = scmp.eq.s32.totalorder %s10, 1
    %p116 = por %p114, %p115
    %p117 = scmp.ne.s32.totalorder %s109, %s112
    %p118 = scmp.eq.s32.totalorder %s10, 0
    %p119 = por %p117, %p118
    %p120 = scmp.ne.s32.totalorder %s109, %s112
    %p121 = scmp.eq.s32.totalorder %s15, 1
    %p122 = por %p120, %p121
    %p123 = scmp.ne.s32.totalorder %s112, %s113
    %p124 = scmp.eq.s32.totalorder %s15, 0
    %p125 = por %p123, %p124
    %p126 = scmp.ne.s32.totalorder %s112, %s113
    %p127 = scmp.eq.s32.totalorder %s16, 1
    %p128 = por %p126, %p127
    %p130 = scmp.ne.s32.totalorder %s113, %s129
    %p131 = scmp.eq.s32.totalorder %s16, 0
    %p132 = por %p130, %p131
    %p133 = scmp.le.s32.totalorder 1, %s10
    %p134 = scmp.lt.s32.totalorder %s10, 3
    %p135 = pnand %p133, %p134
    %p136 = pneg %p135
    // Predicated region
    $region9: #{conv_block.3} parent=5 // pred_check
      _
    $region10: #{conv_block.3} parent=5 // pred_check_branch
      %138 = sbr.rel (%p135) target = $region12
    $region11: #{conv_block.3} parent=5 // pred_region
      %s139 = ssub.s32 %s10, 1
      // Predicated region
      $region13: #{conv_block.3} parent=11 // pred_check
        %p140 = pneg %p57
      $region14: #{conv_block.3} parent=11 // pred_check_branch
        %142 = sbr.rel (%p140) target = $region16
      $region15: #{conv_block.3} parent=11 // pred_region
        _
      $region16: #{conv_block.3} parent=11 // pred_fallthru
        _
      // Predicated region
      $region17: #{conv_block.3} parent=11 // pred_check
        %p143 = pneg %p78
      $region18: #{conv_block.3} parent=11 // pred_check_branch
        %145 = sbr.rel (%p143) target = $region20
      $region19: #{conv_block.3} parent=11 // pred_region
        _
      $region20: #{conv_block.3} parent=11 // pred_fallthru
        _
      // Predicated region
      $region21: #{conv_block.3} parent=11 // pred_check
        %p146 = pneg %p99
      $region22: #{conv_block.3} parent=11 // pred_check_branch
        %148 = sbr.rel (%p146) target = $region24
      $region23: #{conv_block.3} parent=11 // pred_region
        _
      $region24: #{conv_block.3} parent=11 // pred_fallthru
        _
    $region12: #{conv_block.3} parent=5 // pred_fallthru
      _
    %p149 = scmp.lt.s32.totalorder %s10, 2
    // Predicated region
    $region25: #{conv_block.3} parent=5 // pred_check
      %p150 = pneg %p149
    $region26: #{conv_block.3} parent=5 // pred_check_branch
      %152 = sbr.rel (%p150) target = $region28
    $region27: #{conv_block.3} parent=5 // pred_region
      // Predicated region
      $region29: #{conv_block.3} parent=27 // pred_check
        %p153 = pneg %p30
      $region30: #{conv_block.3} parent=27 // pred_check_branch
        %155 = sbr.rel (%p153) target = $region32
      $region31: #{conv_block.3} parent=27 // pred_region
        %s156 = smul.u32 32, %s10
        %p157 = scmp.lt.s32.totalorder %s156, 63
        %s158 = scalar_select %p157, %s156, 63
        %s159 = smul.addr %s158, 8
        %s160 = scalar_lea.vmem %s0, %s159
        %s161 = smul.u32 32, %s10
      $region32: #{conv_block.3} parent=27 // pred_fallthru
        _
    $region28: #{conv_block.3} parent=5 // pred_fallthru
      _
    %p162 = scmp.le.s32.totalorder 1, %s10
    %p163 = scmp.lt.s32.totalorder %s10, 3
    %p164 = pnand %p162, %p163
    %p165 = pneg %p164
    // Predicated region
    $region33: #{conv_block.3} parent=5 // pred_check
      _
    $region34: #{conv_block.3} parent=5 // pred_check_branch
      %167 = sbr.rel (%p164) target = $region36
    $region35: #{conv_block.3} parent=5 // pred_region
      %s168 = ssub.s32 %s10, 1
      %s169 = smul.u32 32, %s15
      %p170 = scmp.lt.s32.totalorder %s169, 63
      %s171 = scalar_select %p170, %s169, 63
      %s172 = smul.addr %s171, 8
      %s173 = scalar_lea.vmem %s0, %s172
      %p174 = pneg %p36
      %p175 = pneg %p33
      %p176 = pneg %p57
      %p177 = pneg %p54
      %p178 = pneg %p78
      %p179 = pneg %p75
      %p180 = pneg %p99
      %p181 = pneg %p96
      %p182 = pneg %p125
      %p183 = pneg %p122
      %s184 = smul.u32 32, %s15
      %p185 = scmp.lt.s32.totalorder %s184, 63
      %s186 = scalar_select %p185, %s184, 63
      %s187 = smul.addr %s186, 8
      %s188 = scalar_lea.vmem %s4, %s187
      %s189 = smul.u32 32, %s15
      %p190 = scmp.lt.s32.totalorder %s189, 63
      %s191 = scalar_select %p190, %s189, 63
      %s192 = smul.addr %s191, 8
      %s193 = scalar_lea.vmem %s0, %s192
      %s194 = smul.u32 32, %s15
      %s195 = smul.u32 32, %s15
      %p196 = scmp.lt.s32.totalorder %s195, 63
      %s197 = scalar_select %p196, %s195, 63
      %s198 = smul.addr %s197, 8
      %s199 = scalar_lea.vmem %s4, %s198
      %s200 = smul.u32 32, %s15
      %v201 = vld [vmem:[%s1] sm:$0x1]
      %v202 = vmul.f32 %v201, 0.001953125
      %v203 = vld [vmem:[%s1 + $0x1] sm:$0x1]
      %v204 = vmul.f32 %v203, 0.001953125
      %v205 = vmul.f32 %v202, %v202
      %v206 = vsub.f32 %v204, %v205
      %v207 = vadd.f32 %v206, 1e-05
      %v208 = vrsqrt.pop %v207
      %v209 = vld [vmem:[%s2] sm:$0x1]
      %v210 = vmul.f32 %v208, %v209
      %v211 = vld [vmem:[%s3] sm:$0x1]
      %v212 = vmul.f32 %v202, %v210
      %v213 = vsub.f32 %v211, %v212
      %v214 = vld [vmem:[%s193] sm:$0xff]
      %v215 = vld [vmem:[%s193 + $0x8] sm:$0xff]
      %v216 = vld [vmem:[%s193 + $0x10] sm:$0xff]
      %v217 = vld [vmem:[%s193 + $0x18] sm:$0xff]
      %v218 = vld [vmem:[%s193 + $0x20] sm:$0xff]
      %v219 = vld [vmem:[%s193 + $0x28] sm:$0xff]
      %v220 = vld [vmem:[%s193 + $0x30] sm:$0xff]
      %v221 = vld [vmem:[%s193 + $0x38] sm:$0xff]
      %v222 = vld [vmem:[%s193 + $0x40] sm:$0xff]
      %v223 = vld [vmem:[%s193 + $0x48] sm:$0xff]
      %v224 = vld [vmem:[%s193 + $0x50] sm:$0xff]
      %v225 = vld [vmem:[%s193 + $0x58] sm:$0xff]
      %v226 = vld [vmem:[%s193 + $0x60] sm:$0xff]
      %v227 = vld [vmem:[%s193 + $0x68] sm:$0xff]
      %v228 = vld [vmem:[%s193 + $0x70] sm:$0xff]
      %v229 = vld [vmem:[%s193 + $0x78] sm:$0xff]
      %v230 = vld [vmem:[%s193 + $0x80] sm:$0xff]
      %v231 = vld [vmem:[%s193 + $0x88] sm:$0xff]
      %v232 = vld [vmem:[%s193 + $0x90] sm:$0xff]
      %v233 = vld [vmem:[%s193 + $0x98] sm:$0xff]
      %v234 = vld [vmem:[%s193 + $0xa0] sm:$0xff]
      %v235 = vld [vmem:[%s193 + $0xa8] sm:$0xff]
      %v236 = vld [vmem:[%s193 + $0xb0] sm:$0xff]
      %v237 = vld [vmem:[%s193 + $0xb8] sm:$0xff]
      %v238 = vld [vmem:[%s193 + $0xc0] sm:$0xff]
      %v239 = vld [vmem:[%s193 + $0xc8] sm:$0xff]
      %v240 = vld [vmem:[%s193 + $0xd0] sm:$0xff]
      %v241 = vld [vmem:[%s193 + $0xd8] sm:$0xff]
      %v242 = vld [vmem:[%s193 + $0xe0] sm:$0xff]
      %v243 = vld [vmem:[%s193 + $0xe8] sm:$0xff]
      %v244 = vld [vmem:[%s193 + $0xf0] sm:$0xff]
      %v245 = vld [vmem:[%s193 + $0xf8] sm:$0xff]
      %v246 = vlaneseq
      %v247 = vshrl.u32 %v246, 7
      %v248 = vsub.s32 0, %v247
      %v249 = vrot.slane %v210, %v248
      %v250 = vmul.f32 %v214, %v249
      %v251 = vmul.f32 %v215, %v249
      %v252 = vmul.f32 %v216, %v249
      %v253 = vmul.f32 %v217, %v249
      %v254 = vmul.f32 %v218, %v249
      %v255 = vmul.f32 %v219, %v249
      %v256 = vmul.f32 %v220, %v249
      %v257 = vmul.f32 %v221, %v249
      %v258 = vmul.f32 %v222, %v249
      %v259 = vmul.f32 %v223, %v249
      %v260 = vmul.f32 %v224, %v249
      %v261 = vmul.f32 %v225, %v249
      %v262 = vmul.f32 %v226, %v249
      %v263 = vmul.f32 %v227, %v249
      %v264 = vmul.f32 %v228, %v249
      %v265 = vmul.f32 %v229, %v249
      %v266 = vmul.f32 %v230, %v249
      %v267 = vmul.f32 %v231, %v249
      %v268 = vmul.f32 %v232, %v249
      %v269 = vmul.f32 %v233, %v249
      %v270 = vmul.f32 %v234, %v249
      %v271 = vmul.f32 %v235, %v249
      %v272 = vmul.f32 %v236, %v249
      %v273 = vmul.f32 %v237, %v249
      %v274 = vmul.f32 %v238, %v249
      %v275 = vmul.f32 %v239, %v249
      %v276 = vmul.f32 %v240, %v249
      %v277 = vmul.f32 %v241, %v249
      %v278 = vmul.f32 %v242, %v249
      %v279 = vmul.f32 %v243, %v249
      %v280 = vmul.f32 %v244, %v249
      %v281 = vmul.f32 %v245, %v249
      %v283 = vlaneseq
      %v284 = vshrl.u32 %v283, 7
      %v285 = vsub.s32 0, %v284
      %v286 = vrot.slane %v213, %v285
      %v288 = vadd.f32 %v250, %v286
      %v289 = vadd.f32 %v251, %v286
      %v290 = vadd.f32 %v252, %v286
      %v291 = vadd.f32 %v253, %v286
      %v292 = vadd.f32 %v254, %v286
      %v293 = vadd.f32 %v255, %v286
      %v294 = vadd.f32 %v256, %v286
      %v295 = vadd.f32 %v257, %v286
      %v296 = vadd.f32 %v258, %v286
      %v297 = vadd.f32 %v259, %v286
      %v298 = vadd.f32 %v260, %v286
      %v299 = vadd.f32 %v261, %v286
      %v300 = vadd.f32 %v262, %v286
      %v301 = vadd.f32 %v263, %v286
      %v302 = vadd.f32 %v264, %v286
      %v303 = vadd.f32 %v265, %v286
      %v304 = vadd.f32 %v266, %v286
      %v305 = vadd.f32 %v267, %v286
      %v306 = vadd.f32 %v268, %v286
      %v307 = vadd.f32 %v269, %v286
      %v308 = vadd.f32 %v270, %v286
      %v309 = vadd.f32 %v271, %v286
      %v310 = vadd.f32 %v272, %v286
      %v311 = vadd.f32 %v273, %v286
      %v312 = vadd.f32 %v274, %v286
      %v313 = vadd.f32 %v275, %v286
      %v314 = vadd.f32 %v276, %v286
      %v315 = vadd.f32 %v277, %v286
      %v316 = vadd.f32 %v278, %v286
      %v317 = vadd.f32 %v279, %v286
      %v318 = vadd.f32 %v280, %v286
      %v319 = vadd.f32 %v281, %v286
      %v320 = vmax.f32 %v288, 0.0
      %v321 = vmax.f32 %v289, 0.0
      %v322 = vmax.f32 %v290, 0.0
      %v323 = vmax.f32 %v291, 0.0
      %v324 = vmax.f32 %v292, 0.0
      %v325 = vmax.f32 %v293, 0.0
      %v326 = vmax.f32 %v294, 0.0
      %v327 = vmax.f32 %v295, 0.0
      %v328 = vmax.f32 %v296, 0.0
      %v329 = vmax.f32 %v297, 0.0
      %v330 = vmax.f32 %v298, 0.0
      %v331 = vmax.f32 %v299, 0.0
      %v332 = vmax.f32 %v300, 0.0
      %v333 = vmax.f32 %v301, 0.0
      %v334 = vmax.f32 %v302, 0.0
      %v335 = vmax.f32 %v303, 0.0
      %v336 = vmax.f32 %v304, 0.0
      %v337 = vmax.f32 %v305, 0.0
      %v338 = vmax.f32 %v306, 0.0
      %v339 = vmax.f32 %v307, 0.0
      %v340 = vmax.f32 %v308, 0.0
      %v341 = vmax.f32 %v309, 0.0
      %v342 = vmax.f32 %v310, 0.0
      %v343 = vmax.f32 %v311, 0.0
      %v344 = vmax.f32 %v312, 0.0
      %v345 = vmax.f32 %v313, 0.0
      %v346 = vmax.f32 %v314, 0.0
      %v347 = vmax.f32 %v315, 0.0
      %v348 = vmax.f32 %v316, 0.0
      %v349 = vmax.f32 %v317, 0.0
      %v350 = vmax.f32 %v318, 0.0
      %v351 = vmax.f32 %v319, 0.0
      %352 = vst [vmem:[%s199] sm:$0xff] %v320
      %353 = vst [vmem:[%s199 + $0x8] sm:$0xff] %v321
      %354 = vst [vmem:[%s199 + $0x10] sm:$0xff] %v322
      %355 = vst [vmem:[%s199 + $0x18] sm:$0xff] %v323
      %356 = vst [vmem:[%s199 + $0x20] sm:$0xff] %v324
      %357 = vst [vmem:[%s199 + $0x28] sm:$0xff] %v325
      %358 = vst [vmem:[%s199 + $0x30] sm:$0xff] %v326
      %359 = vst [vmem:[%s199 + $0x38] sm:$0xff] %v327
      %360 = vst [vmem:[%s199 + $0x40] sm:$0xff] %v328
      %361 = vst [vmem:[%s199 + $0x48] sm:$0xff] %v329
      %362 = vst [vmem:[%s199 + $0x50] sm:$0xff] %v330
      %363 = vst [vmem:[%s199 + $0x58] sm:$0xff] %v331
      %364 = vst [vmem:[%s199 + $0x60] sm:$0xff] %v332
      %365 = vst [vmem:[%s199 + $0x68] sm:$0xff] %v333
      %366 = vst [vmem:[%s199 + $0x70] sm:$0xff] %v334
      %367 = vst [vmem:[%s199 + $0x78] sm:$0xff] %v335
      %368 = vst [vmem:[%s199 + $0x80] sm:$0xff] %v336
      %369 = vst [vmem:[%s199 + $0x88] sm:$0xff] %v337
      %370 = vst [vmem:[%s199 + $0x90] sm:$0xff] %v338
      %371 = vst [vmem:[%s199 + $0x98] sm:$0xff] %v339
      %372 = vst [vmem:[%s199 + $0xa0] sm:$0xff] %v340
      %373 = vst [vmem:[%s199 + $0xa8] sm:$0xff] %v341
      %374 = vst [vmem:[%s199 + $0xb0] sm:$0xff] %v342
      %375 = vst [vmem:[%s199 + $0xb8] sm:$0xff] %v343
      %376 = vst [vmem:[%s199 + $0xc0] sm:$0xff] %v344
      %377 = vst [vmem:[%s199 + $0xc8] sm:$0xff] %v345
      %378 = vst [vmem:[%s199 + $0xd0] sm:$0xff] %v346
      %379 = vst [vmem:[%s199 + $0xd8] sm:$0xff] %v347
      %380 = vst [vmem:[%s199 + $0xe0] sm:$0xff] %v348
      %381 = vst [vmem:[%s199 + $0xe8] sm:$0xff] %v349
      %382 = vst [vmem:[%s199 + $0xf0] sm:$0xff] %v350
      %383 = vst [vmem:[%s199 + $0xf8] sm:$0xff] %v351
      %s384 = smul.u32 32, %s15
      %p385 = scmp.lt.s32.totalorder %s384, 63
      %s386 = scalar_select %p385, %s384, 63
      %s387 = smul.addr %s386, 8
      %s388 = scalar_lea.vmem %s4, %s387
      // Predicated region
      $region37: #{conv_block.3} parent=35 // pred_check
        %p389 = pneg %p122
      $region38: #{conv_block.3} parent=35 // pred_check_branch
        %391 = sbr.rel (%p389) target = $region40
      $region39: #{conv_block.3} parent=35 // pred_region
        %s392 = smul.u32 32, %s15
      $region40: #{conv_block.3} parent=35 // pred_fallthru
        _
    $region36: #{conv_block.3} parent=5 // pred_fallthru
      _
    %p393 = scmp.le.s32.totalorder 2, %s10
    // Predicated region
    $region41: #{conv_block.3} parent=5 // pred_check
      %p394 = pneg %p393
    $region42: #{conv_block.3} parent=5 // pred_check_branch
      %396 = sbr.rel (%p394) target = $region44
    $region43: #{conv_block.3} parent=5 // pred_region
      %s397 = ssub.s32 %s10, 2
      // Predicated region
      $region45: #{conv_block.3} parent=43 // pred_check
        %p398 = pneg %p128
      $region46: #{conv_block.3} parent=43 // pred_check_branch
        %400 = sbr.rel (%p398) target = $region48
      $region47: #{conv_block.3} parent=43 // pred_region
        %s401 = smul.u32 32, %s16
        %p402 = scmp.lt.s32.totalorder %s401, 63
        %s403 = scalar_select %p402, %s401, 63
        %s404 = smul.addr %s403, 8
        %s405 = scalar_lea.vmem %s4, %s404
      $region48: #{conv_block.3} parent=43 // pred_fallthru
        _
    $region44: #{conv_block.3} parent=5 // pred_fallthru
      _
  $region6: #{conv_block.3} parent=0 // loop_footer
    %s14 = sadd.s32 1, %s10
  $region7: #{conv_block.3} parent=0 // loop_footer_branch
    %9 = sbr.rel target = $region3
  $region8: #{conv_block.3} parent=0 // loop_exit
    _

// kernel: conv_block.2
$region0: #{conv_block.2}
  #allocation0 [shape = 'u32[]', space=smem, size = 0x4, offset = 0x4, fixed_abs, tag = 'smem constant byte address 0x4 - core index']
  #allocation1 [shape = 'u32[144,128]{1,0:T(1,128)}', space=vmem, size = 0x12000, scoped, tag = 'internal scratch']
  %s0 = inlined_call_operand.vmem [shape: bf16[512,128], index: 0, kind: input, shape index: {}]
  %s1 = inlined_call_operand.vmem [shape: bf16[128,128], index: 1, kind: input, shape index: {}]
  %s2 = inlined_call_operand.vmem [shape: f32[1,128], index: 2, kind: input, shape index: {}]
  %s3 = inlined_call_operand.vmem [shape: f32[512,128], index: 3, kind: output, shape index: {0}]
  %s4 = inlined_call_operand.vmem [shape: f32[8,128], index: 4, kind: output, shape index: {1}]
  %5 = xla_tuple %s3, %s4
  %s6 = sld [smem:[#allocation0]]
  $region57: #{conv_block.2} parent=0
    _
  %s8 = ssub.s32 1, %s6
  %s9 = scalar_select 0, %s8, %s6
  loop: start=0, step=1, limit=4
  $region2: #{conv_block.2} parent=0 // loop_pre_header
    _
  $region3: #{conv_block.2} parent=0 // loop_header
    %s11 = sphi 0, %s15
    %p12 = scmp.ge.s32.totalorder %s11, 4
    %s21 = sphi 0, %s23
    %s24 = sphi 0, %s21
    %s25 = sphi 0, %s24
    %s41 = sphi 0, %s25
    %s45 = sphi 0, %s45
    %s47 = sphi 0, %s45
    %s48 = sphi 0, %s47
    %s62 = sphi 0, %s48
    %s66 = sphi 0, %s66
    %s68 = sphi 0, %s66
    %s69 = sphi 0, %s68
    %s83 = sphi 0, %s69
    %s89 = sphi 0, %s91
    %s92 = sphi 0, %s89
    %s93 = sphi 0, %s92
    %s109 = sphi 0, %s93
    %s113 = sphi 0, %s113
    %s115 = sphi 0, %s113
    %s116 = sphi 0, %s115
    %s130 = sphi 0, %s116
  $region4: #{conv_block.2} parent=0 // loop_header_branch
    %14 = sbr.rel (%p12) target = $region8
  $region5: #{conv_block.2} parent=0 // loop_body
    %s16 = ssub.s32 %s11, 1
    %s17 = ssub.s32 %s11, 2
    %s18 = sadd.s32 %s11, 1
    %s19 = ssub.s32 %s11, %s18
    %p20 = scmp.eq.s32.totalorder %s19, 0
    %s22 = sadd.s32 %s21, 1
    %s23 = scalar_select %p20, %s21, %s22
    %p26 = pneg %p20
    %p27 = scmp.eq.s32.totalorder %s11, 1
    %p28 = por %p26, %p27
    %p29 = scmp.ne.s32.totalorder %s21, %s24
    %p30 = scmp.eq.s32.totalorder %s11, 0
    %p31 = por %p29, %p30
    %p32 = scmp.ne.s32.totalorder %s21, %s24
    %p33 = scmp.eq.s32.totalorder %s16, 1
    %p34 = por %p32, %p33
    %p35 = scmp.ne.s32.totalorder %s24, %s25
    %p36 = scmp.eq.s32.totalorder %s16, 0
    %p37 = por %p35, %p36
    %p38 = scmp.ne.s32.totalorder %s24, %s25
    %p39 = scmp.eq.s32.totalorder %s17, 1
    %p40 = por %p38, %p39
    %p42 = scmp.ne.s32.totalorder %s25, %s41
    %p43 = scmp.eq.s32.totalorder %s17, 0
    %p44 = por %p42, %p43
    %s46 = sadd.s32 %s45, 1
    %p49 = scmp.eq.s32.totalorder %s11, 1
    %p50 = scmp.ne.s32.totalorder %s45, %s47
    %p51 = scmp.eq.s32.totalorder %s11, 0
    %p52 = por %p50, %p51
    %p53 = scmp.ne.s32.totalorder %s45, %s47
    %p54 = scmp.eq.s32.totalorder %s16, 1
    %p55 = por %p53, %p54
    %p56 = scmp.ne.s32.totalorder %s47, %s48
    %p57 = scmp.eq.s32.totalorder %s16, 0
    %p58 = por %p56, %p57
    %p59 = scmp.ne.s32.totalorder %s47, %s48
    %p60 = scmp.eq.s32.totalorder %s17, 1
    %p61 = por %p59, %p60
    %p63 = scmp.ne.s32.totalorder %s48, %s62
    %p64 = scmp.eq.s32.totalorder %s17, 0
    %p65 = por %p63, %p64
    %s67 = sadd.s32 %s66, 1
    %p70 = scmp.eq.s32.totalorder %s11, 1
    %p71 = scmp.ne.s32.totalorder %s66, %s68
    %p72 = scmp.eq.s32.totalorder %s11, 0
    %p73 = por %p71, %p72
    %p74 = scmp.ne.s32.totalorder %s66, %s68
    %p75 = scmp.eq.s32.totalorder %s16, 1
    %p76 = por %p74, %p75
    %p77 = scmp.ne.s32.totalorder %s68, %s69
    %p78 = scmp.eq.s32.totalorder %s16, 0
    %p79 = por %p77, %p78
    %p80 = scmp.ne.s32.totalorder %s68, %s69
    %p81 = scmp.eq.s32.totalorder %s17, 1
    %p82 = por %p80, %p81
    %p84 = scmp.ne.s32.totalorder %s69, %s83
    %p85 = scmp.eq.s32.totalorder %s17, 0
    %p86 = por %p84, %p85
    %s87 = ssub.s32 %s11, %s18
    %p88 = scmp.eq.s32.totalorder %s87, 0
    %s90 = sadd.s32 %s89, 1
    %s91 = scalar_select %p88, %s89, %s90
    %p94 = pneg %p88
    %p95 = scmp.eq.s32.totalorder %s11, 1
    %p96 = por %p94, %p95
    %p97 = scmp.ne.s32.totalorder %s89, %s92
    %p98 = scmp.eq.s32.totalorder %s11, 0
    %p99 = por %p97, %p98
    %p100 = scmp.ne.s32.totalorder %s89, %s92
    %p101 = scmp.eq.s32.totalorder %s16, 1
    %p102 = por %p100, %p101
    %p103 = scmp.ne.s32.totalorder %s92, %s93
    %p104 = scmp.eq.s32.totalorder %s16, 0
    %p105 = por %p103, %p104
    %p106 = scmp.ne.s32.totalorder %s92, %s93
    %p107 = scmp.eq.s32.totalorder %s17, 1
    %p108 = por %p106, %p107
    %p110 = scmp.ne.s32.totalorder %s93, %s109
    %p111 = scmp.eq.s32.totalorder %s17, 0
    %p112 = por %p110, %p111
    %s114 = sadd.s32 %s113, 1
    %p117 = scmp.eq.s32.totalorder %s11, 1
    %p118 = scmp.ne.s32.totalorder %s113, %s115
    %p119 = scmp.eq.s32.totalorder %s11, 0
    %p120 = por %p118, %p119
    %p121 = scmp.ne.s32.totalorder %s113, %s115
    %p122 = scmp.eq.s32.totalorder %s16, 1
    %p123 = por %p121, %p122
    %p124 = scmp.ne.s32.totalorder %s115, %s116
    %p125 = scmp.eq.s32.totalorder %s16, 0
    %p126 = por %p124, %p125
    %p127 = scmp.ne.s32.totalorder %s115, %s116
    %p128 = scmp.eq.s32.totalorder %s17, 1
    %p129 = por %p127, %p128
    %p131 = scmp.ne.s32.totalorder %s116, %s130
    %p132 = scmp.eq.s32.totalorder %s17, 0
    %p133 = por %p131, %p132
    %p134 = scmp.le.s32.totalorder 1, %s11
    %p135 = scmp.lt.s32.totalorder %s11, 3
    %p136 = pnand %p134, %p135
    %p137 = pneg %p136
    // Predicated region
    $region9: #{conv_block.2} parent=5 // pred_check
      _
    $region10: #{conv_block.2} parent=5 // pred_check_branch
      %139 = sbr.rel (%p136) target = $region12
    $region11: #{conv_block.2} parent=5 // pred_region
      %s140 = ssub.s32 %s11, 1
      // Predicated region
      $region13: #{conv_block.2} parent=11 // pred_check
        %p141 = pneg %p58
      $region14: #{conv_block.2} parent=11 // pred_check_branch
        %143 = sbr.rel (%p141) target = $region16
      $region15: #{conv_block.2} parent=11 // pred_region
        _
      $region16: #{conv_block.2} parent=11 // pred_fallthru
        _
      // Predicated region
      $region17: #{conv_block.2} parent=11 // pred_check
        %p144 = pneg %p79
      $region18: #{conv_block.2} parent=11 // pred_check_branch
        %146 = sbr.rel (%p144) target = $region20
      $region19: #{conv_block.2} parent=11 // pred_region
        _
      $region20: #{conv_block.2} parent=11 // pred_fallthru
        _
    $region12: #{conv_block.2} parent=5 // pred_fallthru
      _
    %p147 = scmp.lt.s32.totalorder %s11, 2
    // Predicated region
    $region21: #{conv_block.2} parent=5 // pred_check
      %p148 = pneg %p147
    $region22: #{conv_block.2} parent=5 // pred_check_branch
      %150 = sbr.rel (%p148) target = $region24
    $region23: #{conv_block.2} parent=5 // pred_region
      // Predicated region
      $region25: #{conv_block.2} parent=23 // pred_check
        %p151 = pneg %p31
      $region26: #{conv_block.2} parent=23 // pred_check_branch
        %153 = sbr.rel (%p151) target = $region28
      $region27: #{conv_block.2} parent=23 // pred_region
        %s154 = smul.u32 32, %s11
        %p155 = scmp.lt.s32.totalorder %s154, 63
        %s156 = scalar_select %p155, %s154, 63
        %s157 = smul.addr %s156, 4
        %s158 = scalar_lea.vmem %s0, %s157
        %s159 = smul.u32 32, %s11
      $region28: #{conv_block.2} parent=23 // pred_fallthru
        _
    $region24: #{conv_block.2} parent=5 // pred_fallthru
      _
    %p160 = scmp.le.s32.totalorder 1, %s11
    %p161 = scmp.lt.s32.totalorder %s11, 3
    %p162 = pnand %p160, %p161
    %p163 = pneg %p162
    // Predicated region
    $region29: #{conv_block.2} parent=5 // pred_check
      _
    $region30: #{conv_block.2} parent=5 // pred_check_branch
      %165 = sbr.rel (%p162) target = $region32
    $region31: #{conv_block.2} parent=5 // pred_region
      %s166 = ssub.s32 %s11, 1
      %s167 = smul.u32 32, %s16
      %p168 = scmp.lt.s32.totalorder %s167, 63
      %s169 = scalar_select %p168, %s167, 63
      %s170 = smul.addr %s169, 4
      %s171 = scalar_lea.vmem %s0, %s170
      %p172 = pneg %p37
      %p173 = pneg %p34
      %p174 = pneg %p58
      %p175 = pneg %p55
      %p176 = pneg %p79
      %p177 = pneg %p76
      %p178 = pneg %p105
      %p179 = pneg %p102
      %s180 = smul.u32 32, %s16
      %p181 = scmp.lt.s32.totalorder %s180, 63
      %s182 = scalar_select %p181, %s180, 63
      %s183 = smul.addr %s182, 8
      %s184 = scalar_lea.vmem %s3, %s183
      %p185 = pneg %p126
      %p186 = pneg %p123
      %s187 = smul.u32 32, %s16
      %p188 = scmp.lt.s32.totalorder %s187, 63
      %s189 = scalar_select %p188, %s187, 63
      %s190 = smul.addr %s189, 4
      %s191 = scalar_lea.vmem %s0, %s190
      %s192 = smul.u32 32, %s16
      %s193 = smul.u32 32, %s16
      %p194 = scmp.lt.s32.totalorder %s193, 63
      %s195 = scalar_select %p194, %s193, 63
      %s196 = smul.addr %s195, 8
      %s197 = scalar_lea.vmem %s3, %s196
      %s198 = smul.u32 32, %s16
      %p200 = scmp.eq.s32.totalorder %s16, 0
      // Predicated region
      $region33: #{conv_block.2} parent=31 // pred_check
        %p201 = pneg %p200
      $region34: #{conv_block.2} parent=31 // pred_check_branch
        %203 = sbr.rel (%p201) target = $region36
      $region35: #{conv_block.2} parent=31 // pred_region
        %204 = vst [vmem:[%s4] sm:$0xff] 0.0
      $region36: #{conv_block.2} parent=31 // pred_fallthru
        _
      %v205 = vld [vmem:[%s191] sm:$0xf]
      %v206 = vld [vmem:[%s191 + $0x4] sm:$0xf]
      %v207 = vld [vmem:[%s191 + $0x8] sm:$0xf]
      %v208 = vld [vmem:[%s191 + $0xc] sm:$0xf]
      %v209 = vld [vmem:[%s191 + $0x10] sm:$0xf]
      %v210 = vld [vmem:[%s191 + $0x14] sm:$0xf]
      %v211 = vld [vmem:[%s191 + $0x18] sm:$0xf]
      %v212 = vld [vmem:[%s191 + $0x1c] sm:$0xf]
      %v213 = vld [vmem:[%s191 + $0x20] sm:$0xf]
      %v214 = vld [vmem:[%s191 + $0x24] sm:$0xf]
      %v215 = vld [vmem:[%s191 + $0x28] sm:$0xf]
      %v216 = vld [vmem:[%s191 + $0x2c] sm:$0xf]
      %v217 = vld [vmem:[%s191 + $0x30] sm:$0xf]
      %v218 = vld [vmem:[%s191 + $0x34] sm:$0xf]
      %v219 = vld [vmem:[%s191 + $0x38] sm:$0xf]
      %v220 = vld [vmem:[%s191 + $0x3c] sm:$0xf]
      %v221 = vld [vmem:[%s191 + $0x40] sm:$0xf]
      %v222 = vld [vmem:[%s191 + $0x44] sm:$0xf]
      %v223 = vld [vmem:[%s191 + $0x48] sm:$0xf]
      %v224 = vld [vmem:[%s191 + $0x4c] sm:$0xf]
      %v225 = vld [vmem:[%s191 + $0x50] sm:$0xf]
      %v226 = vld [vmem:[%s191 + $0x54] sm:$0xf]
      %v227 = vld [vmem:[%s191 + $0x58] sm:$0xf]
      %v228 = vld [vmem:[%s191 + $0x5c] sm:$0xf]
      %v229 = vld [vmem:[%s191 + $0x60] sm:$0xf]
      %v230 = vld [vmem:[%s191 + $0x64] sm:$0xf]
      %v231 = vld [vmem:[%s191 + $0x68] sm:$0xf]
      %v232 = vld [vmem:[%s191 + $0x6c] sm:$0xf]
      %v233 = vld [vmem:[%s191 + $0x70] sm:$0xf]
      %v234 = vld [vmem:[%s191 + $0x74] sm:$0xf]
      %v235 = vld [vmem:[%s191 + $0x78] sm:$0xf]
      %v236 = vld [vmem:[%s191 + $0x7c] sm:$0xf]
      %v237 = vld [vmem:[%s1] sm:$0xf]
      %v238 = vld [vmem:[%s1 + $0x4] sm:$0xf]
      %v239 = vld [vmem:[%s1 + $0x8] sm:$0xf]
      %v240 = vld [vmem:[%s1 + $0xc] sm:$0xf]
      %v241 = vld [vmem:[%s1 + $0x10] sm:$0xf]
      %v242 = vld [vmem:[%s1 + $0x14] sm:$0xf]
      %v243 = vld [vmem:[%s1 + $0x18] sm:$0xf]
      %v244 = vld [vmem:[%s1 + $0x1c] sm:$0xf]
      %v245 = vld [vmem:[%s1 + $0x20] sm:$0xf]
      %v246 = vld [vmem:[%s1 + $0x24] sm:$0xf]
      %v247 = vld [vmem:[%s1 + $0x28] sm:$0xf]
      %v248 = vld [vmem:[%s1 + $0x2c] sm:$0xf]
      %v249 = vld [vmem:[%s1 + $0x30] sm:$0xf]
      %v250 = vld [vmem:[%s1 + $0x34] sm:$0xf]
      %v251 = vld [vmem:[%s1 + $0x38] sm:$0xf]
      %v252 = vld [vmem:[%s1 + $0x3c] sm:$0xf]
      %v253 = vld [vmem:[%s2] sm:$0x1]
      %v255 = vlaneseq
      %v256 = vshrl.u32 %v255, 7
      %v257 = vsub.s32 0, %v256
      %v258 = vrot.slane %v253, %v257
      %v292 = vunpack.c.l.b16 %v205
      %v293 = vunpack.c.l.b16 %v206
      %v294 = vunpack.c.l.b16 %v207
      %v295 = vunpack.c.l.b16 %v208
      %v296 = vunpack.c.l.b16 %v209
      %v297 = vunpack.c.l.b16 %v210
      %v298 = vunpack.c.l.b16 %v211
      %v299 = vunpack.c.l.b16 %v212
      %v300 = vunpack.c.l.b16 %v213
      %v301 = vunpack.c.l.b16 %v214
      %v302 = vunpack.c.l.b16 %v215
      %v303 = vunpack.c.l.b16 %v216
      %v304 = vunpack.c.l.b16 %v217
      %v305 = vunpack.c.l.b16 %v218
      %v306 = vunpack.c.l.b16 %v219
      %v307 = vunpack.c.l.b16 %v220
      %v308 = vunpack.c.l.b16 %v221
      %v309 = vunpack.c.l.b16 %v222
      %v310 = vunpack.c.l.b16 %v223
      %v311 = vunpack.c.l.b16 %v224
      %v312 = vunpack.c.l.b16 %v225
      %v313 = vunpack.c.l.b16 %v226
      %v314 = vunpack.c.l.b16 %v227
      %v315 = vunpack.c.l.b16 %v228
      %v316 = vunpack.c.l.b16 %v229
      %v317 = vunpack.c.l.b16 %v230
      %v318 = vunpack.c.l.b16 %v231
      %v319 = vunpack.c.l.b16 %v232
      %v320 = vunpack.c.l.b16 %v233
      %v321 = vunpack.c.l.b16 %v234
      %v322 = vunpack.c.l.b16 %v235
      %v323 = vunpack.c.l.b16 %v236
      %v324 = vpack.c.b16 %v293, %v292
      %v325 = vpack.c.b16 %v295, %v294
      %v326 = vpack.c.b16 %v297, %v296
      %v327 = vpack.c.b16 %v299, %v298
      %v328 = vpack.c.b16 %v301, %v300
      %v329 = vpack.c.b16 %v303, %v302
      %v330 = vpack.c.b16 %v305, %v304
      %v331 = vpack.c.b16 %v307, %v306
      %v332 = vpack.c.b16 %v309, %v308
      %v333 = vpack.c.b16 %v311, %v310
      %v334 = vpack.c.b16 %v313, %v312
      %v335 = vpack.c.b16 %v315, %v314
      %v336 = vpack.c.b16 %v317, %v316
      %v337 = vpack.c.b16 %v319, %v318
      %v338 = vpack.c.b16 %v321, %v320
      %v339 = vpack.c.b16 %v323, %v322
      %v372 = vunpack.c.l.b16 %v237
      %v373 = vunpack.c.l.b16 %v238
      %v374 = vunpack.c.l.b16 %v239
      %v375 = vunpack.c.l.b16 %v240
      %v376 = vunpack.c.l.b16 %v241
      %v377 = vunpack.c.l.b16 %v242
      %v378 = vunpack.c.l.b16 %v243
      %v379 = vunpack.c.l.b16 %v244
      %v380 = vunpack.c.l.b16 %v245
      %v381 = vunpack.c.l.b16 %v246
      %v382 = vunpack.c.l.b16 %v247
      %v383 = vunpack.c.l.b16 %v248
      %v384 = vunpack.c.l.b16 %v249
      %v385 = vunpack.c.l.b16 %v250
      %v386 = vunpack.c.l.b16 %v251
      %v387 = vunpack.c.l.b16 %v252
      %v388 = vpack.c.b16 %v373, %v372
      %v389 = vpack.c.b16 %v375, %v374
      %v390 = vpack.c.b16 %v377, %v376
      %v391 = vpack.c.b16 %v379, %v378
      %v392 = vpack.c.b16 %v381, %v380
      %v393 = vpack.c.b16 %v383, %v382
      %v394 = vpack.c.b16 %v385, %v384
      %v395 = vpack.c.b16 %v387, %v386
      %404 = vmatprep.subr.bf16.mxu0 0
      %405 = vmatpush1.bf16.msra.mxu0 %v388
      %406 = vmatprep.subr.bf16.mxu0 0
      %407 = vmatpush1.bf16.msra.mxu0 %v389
      %408 = vmatprep.subr.bf16.mxu0 0
      %409 = vmatpush1.bf16.msra.mxu0 %v390
      %410 = vmatprep.subr.bf16.mxu0 0
      %411 = vmatpush1.bf16.msra.mxu0 %v391
      %412 = vmatprep.subr.bf16.mxu0 0
      %413 = vmatpush1.bf16.msra.mxu0 %v392
      %414 = vmatprep.subr.bf16.mxu0 0
      %415 = vmatpush1.bf16.msra.mxu0 %v393
      %416 = vmatprep.subr.bf16.mxu0 0
      %417 = vmatpush1.bf16.msra.mxu0 %v394
      %418 = vmatprep.subr.bf16.mxu0 0
      %419 = vmatpush1.bf16.msra.mxu0 %v395
      %420 = vmatprep.subr.bf16.mxu0 0
      %421 = vmatpush1.bf16.msra.mxu0 0
      %422 = vmatprep.subr.bf16.mxu0 0
      %423 = vmatpush1.bf16.msra.mxu0 0
      %424 = vmatprep.subr.bf16.mxu0 0
      %425 = vmatpush1.bf16.msra.mxu0 0
      %426 = vmatprep.subr.bf16.mxu0 0
      %427 = vmatpush1.bf16.msra.mxu0 0
      %428 = vmatprep.subr.bf16.mxu0 0
      %429 = vmatpush1.bf16.msra.mxu0 0
      %430 = vmatprep.subr.bf16.mxu0 0
      %431 = vmatpush1.bf16.msra.mxu0 0
      %432 = vmatprep.subr.bf16.mxu0 0
      %433 = vmatpush1.bf16.msra.mxu0 0
      %434 = vmatprep.subr.bf16.mxu0 0
      %435 = vmatpush1.bf16.msra.mxu0 0
      %436 = vmatprep.mubr.bf16.mxu0 0
      %437 = vmatmul.mubr.bf16.gmra.mrb[0].mxu0 %v324
      %v438 = vpop.f32.mrb[0].mxu0
      %v439 = vadd.f32 %v258, %v438
      %v440 = vpop.f32.mrb[0].mxu0
      %v441 = vpop.f32.mrb[0].mxu0
      %v442 = vadd.f32 %v258, %v441
      %v443 = vpop.f32.mrb[0].mxu0
      %444 = vmatprep.mubr.bf16.mxu0 0
      %445 = vmatmul.mubr.bf16.gmra.mrb[0].mxu0 %v325
      %v446 = vpop.f32.mrb[0].mxu0
      %v447 = vadd.f32 %v258, %v446
      %v448 = vpop.f32.mrb[0].mxu0
      %v449 = vpop.f32.mrb[0].mxu0
      %v450 = vadd.f32 %v258, %v449
      %v451 = vpop.f32.mrb[0].mxu0
      %452 = vmatprep.mubr.bf16.mxu0 0
      %453 = vmatmul.mubr.bf16.gmra.mrb[0].mxu0 %v326
      %v454 = vpop.f32.mrb[0].mxu0
      %v455 = vadd.f32 %v258, %v454
      %v456 = vpop.f32.mrb[0].mxu0
      %v457 = vpop.f32.mrb[0].mxu0
      %v458 = vadd.f32 %v258, %v457
      %v459 = vpop.f32.mrb[0].mxu0
      %460 = vmatprep.mubr.bf16.mxu0 0
      %461 = vmatmul.mubr.bf16.gmra.mrb[0].mxu0 %v327
      %v462 = vpop.f32.mrb[0].mxu0
      %v463 = vadd.f32 %v258, %v462
      %v464 = vpop.f32.mrb[0].mxu0
      %v465 = vpop.f32.mrb[0].mxu0
      %v466 = vadd.f32 %v258, %v465
      %v467 = vpop.f32.mrb[0].mxu0
      %468 = vmatprep.mubr.bf16.mxu0 0
      %469 = vmatmul.mubr.bf16.gmra.mrb[0].mxu0 %v328
      %v470 = vpop.f32.mrb[0].mxu0
      %v471 = vadd.f32 %v258, %v470
      %v472 = vpop.f32.mrb[0].mxu0
      %v473 = vpop.f32.mrb[0].mxu0
      %v474 = vadd.f32 %v258, %v473
      %v475 = vpop.f32.mrb[0].mxu0
      %476 = vmatprep.mubr.bf16.mxu0 0
      %477 = vmatmul.mubr.bf16.gmra.mrb[0].mxu0 %v329
      %v478 = vpop.f32.mrb[0].mxu0
      %v479 = vadd.f32 %v258, %v478
      %v480 = vpop.f32.mrb[0].mxu0
      %v481 = vpop.f32.mrb[0].mxu0
      %v482 = vadd.f32 %v258, %v481
      %v483 = vpop.f32.mrb[0].mxu0
      %484 = vmatprep.mubr.bf16.mxu0 0
      %485 = vmatmul.mubr.bf16.gmra.mrb[0].mxu0 %v330
      %v486 = vpop.f32.mrb[0].mxu0
      %v487 = vadd.f32 %v258, %v486
      %v488 = vpop.f32.mrb[0].mxu0
      %v489 = vpop.f32.mrb[0].mxu0
      %v490 = vadd.f32 %v258, %v489
      %v491 = vpop.f32.mrb[0].mxu0
      %492 = vmatprep.mubr.bf16.mxu0 0
      %493 = vmatmul.mubr.bf16.gmra.mrb[0].mxu0 %v331
      %v494 = vpop.f32.mrb[0].mxu0
      %v495 = vadd.f32 %v258, %v494
      %v496 = vpop.f32.mrb[0].mxu0
      %v497 = vpop.f32.mrb[0].mxu0
      %v498 = vadd.f32 %v258, %v497
      %v499 = vpop.f32.mrb[0].mxu0
      %500 = vmatprep.mubr.bf16.mxu0 0
      %501 = vmatmul.mubr.bf16.gmra.mrb[0].mxu0 %v332
      %v502 = vpop.f32.mrb[0].mxu0
      %v503 = vadd.f32 %v258, %v502
      %v504 = vpop.f32.mrb[0].mxu0
      %v505 = vpop.f32.mrb[0].mxu0
      %v506 = vadd.f32 %v258, %v505
      %v507 = vpop.f32.mrb[0].mxu0
      %508 = vmatprep.mubr.bf16.mxu0 0
      %509 = vmatmul.mubr.bf16.gmra.mrb[0].mxu0 %v333
      %v510 = vpop.f32.mrb[0].mxu0
      %v511 = vadd.f32 %v258, %v510
      %v512 = vpop.f32.mrb[0].mxu0
      %v513 = vpop.f32.mrb[0].mxu0
      %v514 = vadd.f32 %v258, %v513
      %v515 = vpop.f32.mrb[0].mxu0
      %516 = vmatprep.mubr.bf16.mxu0 0
      %517 = vmatmul.mubr.bf16.gmra.mrb[0].mxu0 %v334
      %v518 = vpop.f32.mrb[0].mxu0
      %v519 = vadd.f32 %v258, %v518
      %v520 = vpop.f32.mrb[0].mxu0
      %v521 = vpop.f32.mrb[0].mxu0
      %v522 = vadd.f32 %v258, %v521
      %v523 = vpop.f32.mrb[0].mxu0
      %524 = vmatprep.mubr.bf16.mxu0 0
      %525 = vmatmul.mubr.bf16.gmra.mrb[0].mxu0 %v335
      %v526 = vpop.f32.mrb[0].mxu0
      %v527 = vadd.f32 %v258, %v526
      %v528 = vpop.f32.mrb[0].mxu0
      %v529 = vpop.f32.mrb[0].mxu0
      %v530 = vadd.f32 %v258, %v529
      %v531 = vpop.f32.mrb[0].mxu0
      %532 = vmatprep.mubr.bf16.mxu0 0
      %533 = vmatmul.mubr.bf16.gmra.mrb[0].mxu0 %v336
      %v534 = vpop.f32.mrb[0].mxu0
      %v535 = vadd.f32 %v258, %v534
      %v536 = vpop.f32.mrb[0].mxu0
      %v537 = vpop.f32.mrb[0].mxu0
      %v538 = vadd.f32 %v258, %v537
      %v539 = vpop.f32.mrb[0].mxu0
      %540 = vmatprep.mubr.bf16.mxu0 0
      %541 = vmatmul.mubr.bf16.gmra.mrb[0].mxu0 %v337
      %v542 = vpop.f32.mrb[0].mxu0
      %v543 = vadd.f32 %v258, %v542
      %v544 = vpop.f32.mrb[0].mxu0
      %v545 = vpop.f32.mrb[0].mxu0
      %v546 = vadd.f32 %v258, %v545
      %v547 = vpop.f32.mrb[0].mxu0
      %548 = vmatprep.mubr.bf16.mxu0 0
      %549 = vmatmul.mubr.bf16.gmra.mrb[0].mxu0 %v338
      %v550 = vpop.f32.mrb[0].mxu0
      %v551 = vadd.f32 %v258, %v550
      %v552 = vpop.f32.mrb[0].mxu0
      %v553 = vpop.f32.mrb[0].mxu0
      %v554 = vadd.f32 %v258, %v553
      %v555 = vpop.f32.mrb[0].mxu0
      %556 = vmatprep.mubr.bf16.mxu0 0
      %557 = vmatmul.mubr.bf16.gmra.mrb[0].mxu0 %v339
      %v558 = vpop.f32.mrb[0].mxu0
      %v559 = vadd.f32 %v258, %v558
      %v560 = vpop.f32.mrb[0].mxu0
      %v561 = vpop.f32.mrb[0].mxu0
      %v562 = vadd.f32 %v258, %v561
      %v563 = vpop.f32.mrb[0].mxu0
      %564 = vdwg.mxu0
      %565 = vst [vmem:[%s197] sm:$0xff] %v439
      %566 = vst [vmem:[%s197 + $0x8] sm:$0xff] %v442
      %567 = vst [vmem:[%s197 + $0x10] sm:$0xff] %v447
      %568 = vst [vmem:[%s197 + $0x18] sm:$0xff] %v450
      %569 = vst [vmem:[%s197 + $0x20] sm:$0xff] %v455
      %570 = vst [vmem:[%s197 + $0x28] sm:$0xff] %v458
      %571 = vst [vmem:[%s197 + $0x30] sm:$0xff] %v463
      %572 = vst [vmem:[%s197 + $0x38] sm:$0xff] %v466
      %573 = vst [vmem:[%s197 + $0x40] sm:$0xff] %v471
      %574 = vst [vmem:[%s197 + $0x48] sm:$0xff] %v474
      %575 = vst [vmem:[%s197 + $0x50] sm:$0xff] %v479
      %576 = vst [vmem:[%s197 + $0x58] sm:$0xff] %v482
      %577 = vst [vmem:[%s197 + $0x60] sm:$0xff] %v487
      %578 = vst [vmem:[%s197 + $0x68] sm:$0xff] %v490
      %579 = vst [vmem:[%s197 + $0x70] sm:$0xff] %v495
      %580 = vst [vmem:[%s197 + $0x78] sm:$0xff] %v498
      %581 = vst [vmem:[%s197 + $0x80] sm:$0xff] %v503
      %582 = vst [vmem:[%s197 + $0x88] sm:$0xff] %v506
      %583 = vst [vmem:[%s197 + $0x90] sm:$0xff] %v511
      %584 = vst [vmem:[%s197 + $0x98] sm:$0xff] %v514
      %585 = vst [vmem:[%s197 + $0xa0] sm:$0xff] %v519
      %586 = vst [vmem:[%s197 + $0xa8] sm:$0xff] %v522
      %587 = vst [vmem:[%s197 + $0xb0] sm:$0xff] %v527
      %588 = vst [vmem:[%s197 + $0xb8] sm:$0xff] %v530
      %589 = vst [vmem:[%s197 + $0xc0] sm:$0xff] %v535
      %590 = vst [vmem:[%s197 + $0xc8] sm:$0xff] %v538
      %591 = vst [vmem:[%s197 + $0xd0] sm:$0xff] %v543
      %592 = vst [vmem:[%s197 + $0xd8] sm:$0xff] %v546
      %593 = vst [vmem:[%s197 + $0xe0] sm:$0xff] %v551
      %594 = vst [vmem:[%s197 + $0xe8] sm:$0xff] %v554
      %595 = vst [vmem:[%s197 + $0xf0] sm:$0xff] %v559
      %596 = vst [vmem:[%s197 + $0xf8] sm:$0xff] %v562
      %v597 = vld [vmem:[%s4] sm:$0x1]
      %v598 = vadd.f32 %v439, %v442
      %v599 = vadd.f32 %v598, %v447
      %v600 = vadd.f32 %v599, %v450
      %v601 = vadd.f32 %v600, %v455
      %v602 = vadd.f32 %v601, %v458
      %v603 = vadd.f32 %v602, %v463
      %v604 = vadd.f32 %v603, %v466
      %v605 = vadd.f32 %v604, %v471
      %v606 = vadd.f32 %v605, %v474
      %v607 = vadd.f32 %v606, %v479
      %v608 = vadd.f32 %v607, %v482
      %v609 = vadd.f32 %v608, %v487
      %v610 = vadd.f32 %v609, %v490
      %v611 = vadd.f32 %v610, %v495
      %v612 = vadd.f32 %v611, %v498
      %v613 = vadd.f32 %v612, %v503
      %v614 = vadd.f32 %v613, %v506
      %v615 = vadd.f32 %v614, %v511
      %v616 = vadd.f32 %v615, %v514
      %v617 = vadd.f32 %v616, %v519
      %v618 = vadd.f32 %v617, %v522
      %v619 = vadd.f32 %v618, %v527
      %v620 = vadd.f32 %v619, %v530
      %v621 = vadd.f32 %v620, %v535
      %v622 = vadd.f32 %v621, %v538
      %v623 = vadd.f32 %v622, %v543
      %v624 = vadd.f32 %v623, %v546
      %v625 = vadd.f32 %v624, %v551
      %v626 = vadd.f32 %v625, %v554
      %v627 = vadd.f32 %v626, %v559
      %v628 = vadd.f32 %v627, %v562
      %v629 = vrot.slane %v628, 4
      %v630 = vadd.f32 %v628, %v629
      %v631 = vrot.slane %v630, 2
      %v632 = vadd.f32 %v630, %v631
      %v633 = vrot.slane %v632, 1
      %v634 = vadd.f32 %v632, %v633
      %v635 = vadd.f32 %v597, %v634
      %636 = vst [vmem:[%s4] sm:$0x1] %v635
      %v637 = vld [vmem:[%s4 + $0x1] sm:$0x1]
      %v638 = vmul.f32 %v439, %v439
      %v639 = vmul.f32 %v442, %v442
      %v640 = vmul.f32 %v447, %v447
      %v641 = vmul.f32 %v450, %v450
      %v642 = vmul.f32 %v455, %v455
      %v643 = vmul.f32 %v458, %v458
      %v644 = vmul.f32 %v463, %v463
      %v645 = vmul.f32 %v466, %v466
      %v646 = vmul.f32 %v471, %v471
      %v647 = vmul.f32 %v474, %v474
      %v648 = vmul.f32 %v479, %v479
      %v649 = vmul.f32 %v482, %v482
      %v650 = vmul.f32 %v487, %v487
      %v651 = vmul.f32 %v490, %v490
      %v652 = vmul.f32 %v495, %v495
      %v653 = vmul.f32 %v498, %v498
      %v654 = vmul.f32 %v503, %v503
      %v655 = vmul.f32 %v506, %v506
      %v656 = vmul.f32 %v511, %v511
      %v657 = vmul.f32 %v514, %v514
      %v658 = vmul.f32 %v519, %v519
      %v659 = vmul.f32 %v522, %v522
      %v660 = vmul.f32 %v527, %v527
      %v661 = vmul.f32 %v530, %v530
      %v662 = vmul.f32 %v535, %v535
      %v663 = vmul.f32 %v538, %v538
      %v664 = vmul.f32 %v543, %v543
      %v665 = vmul.f32 %v546, %v546
      %v666 = vmul.f32 %v551, %v551
      %v667 = vmul.f32 %v554, %v554
      %v668 = vmul.f32 %v559, %v559
      %v669 = vmul.f32 %v562, %v562
      %v670 = vadd.f32 %v638, %v639
      %v671 = vadd.f32 %v670, %v640
      %v672 = vadd.f32 %v671, %v641
      %v673 = vadd.f32 %v672, %v642
      %v674 = vadd.f32 %v673, %v643
      %v675 = vadd.f32 %v674, %v644
      %v676 = vadd.f32 %v675, %v645
      %v677 = vadd.f32 %v676, %v646
      %v678 = vadd.f32 %v677, %v647
      %v679 = vadd.f32 %v678, %v648
      %v680 = vadd.f32 %v679, %v649
      %v681 = vadd.f32 %v680, %v650
      %v682 = vadd.f32 %v681, %v651
      %v683 = vadd.f32 %v682, %v652
      %v684 = vadd.f32 %v683, %v653
      %v685 = vadd.f32 %v684, %v654
      %v686 = vadd.f32 %v685, %v655
      %v687 = vadd.f32 %v686, %v656
      %v688 = vadd.f32 %v687, %v657
      %v689 = vadd.f32 %v688, %v658
      %v690 = vadd.f32 %v689, %v659
      %v691 = vadd.f32 %v690, %v660
      %v692 = vadd.f32 %v691, %v661
      %v693 = vadd.f32 %v692, %v662
      %v694 = vadd.f32 %v693, %v663
      %v695 = vadd.f32 %v694, %v664
      %v696 = vadd.f32 %v695, %v665
      %v697 = vadd.f32 %v696, %v666
      %v698 = vadd.f32 %v697, %v667
      %v699 = vadd.f32 %v698, %v668
      %v700 = vadd.f32 %v699, %v669
      %v701 = vrot.slane %v700, 4
      %v702 = vadd.f32 %v700, %v701
      %v703 = vrot.slane %v702, 2
      %v704 = vadd.f32 %v702, %v703
      %v705 = vrot.slane %v704, 1
      %v706 = vadd.f32 %v704, %v705
      %v707 = vadd.f32 %v637, %v706
      %708 = vst [vmem:[%s4 + $0x1] sm:$0x1] %v707
      %s709 = smul.u32 32, %s16
      %p710 = scmp.lt.s32.totalorder %s709, 63
      %s711 = scalar_select %p710, %s709, 63
      %s712 = smul.addr %s711, 8
      %s713 = scalar_lea.vmem %s3, %s712
      // Predicated region
      $region37: #{conv_block.2} parent=31 // pred_check
        %p714 = pneg %p102
      $region38: #{conv_block.2} parent=31 // pred_check_branch
        %716 = sbr.rel (%p714) target = $region40
      $region39: #{conv_block.2} parent=31 // pred_region
        %s717 = smul.u32 32, %s16
      $region40: #{conv_block.2} parent=31 // pred_fallthru
        _
      // Predicated region
      $region41: #{conv_block.2} parent=31 // pred_check
        %p718 = pneg %p123
      $region42: #{conv_block.2} parent=31 // pred_check_branch
        %720 = sbr.rel (%p718) target = $region44
      $region43: #{conv_block.2} parent=31 // pred_region
        _
      $region44: #{conv_block.2} parent=31 // pred_fallthru
        _
      // Predicated region
      $region45: #{conv_block.2} parent=31 // pred_check
        %p721 = pneg %p123
      $region46: #{conv_block.2} parent=31 // pred_check_branch
        %723 = sbr.rel (%p721) target = $region48
      $region47: #{conv_block.2} parent=31 // pred_region
        _
      $region48: #{conv_block.2} parent=31 // pred_fallthru
        _
    $region32: #{conv_block.2} parent=5 // pred_fallthru
      _
    %p724 = scmp.le.s32.totalorder 2, %s11
    // Predicated region
    $region49: #{conv_block.2} parent=5 // pred_check
      %p725 = pneg %p724
    $region50: #{conv_block.2} parent=5 // pred_check_branch
      %727 = sbr.rel (%p725) target = $region52
    $region51: #{conv_block.2} parent=5 // pred_region
      %s728 = ssub.s32 %s11, 2
      // Predicated region
      $region53: #{conv_block.2} parent=51 // pred_check
        %p729 = pneg %p108
      $region54: #{conv_block.2} parent=51 // pred_check_branch
        %731 = sbr.rel (%p729) target = $region56
      $region55: #{conv_block.2} parent=51 // pred_region
        %s732 = smul.u32 32, %s17
        %p733 = scmp.lt.s32.totalorder %s732, 63
        %s734 = scalar_select %p733, %s732, 63
        %s735 = smul.addr %s734, 8
        %s736 = scalar_lea.vmem %s3, %s735
      $region56: #{conv_block.2} parent=51 // pred_fallthru
        _
    $region52: #{conv_block.2} parent=5 // pred_fallthru
      _
  $region6: #{conv_block.2} parent=0 // loop_footer
    %s15 = sadd.s32 1, %s11
  $region7: #{conv_block.2} parent=0 // loop_footer_branch
    %10 = sbr.rel target = $region3
  $region8: #{conv_block.2} parent=0 // loop_exit
    _

</llo_original>
